<compile_context>
chip_gen: v7x
topology: tpu7x:2x2x1
jax: 0.10.0
libtpu: 0.0.40
codegen_flags: <defaults>
</compile_context>

<pallas_src>
import functools

import jax
import jax.numpy as jnp
from jax.experimental import pallas as pl
from jax.experimental.pallas import tpu as pltpu


def _layernorm_kernel(x_ref, gamma_ref, beta_ref, o_ref, *, eps, d_layer):
    # x_ref: (tm, D) row tile; gamma/beta: (1, D) full params (constant block
    # index across the grid, so they are DMA'd only once).
    x = x_ref[...].astype(jnp.float32)

    n = float(d_layer)
    mean = jnp.sum(x, axis=-1, keepdims=True) * (1.0 / n)

    # Two-pass variance: the tile is already resident in VMEM, so the second
    # pass is free under the HBM bound and is numerically safe (no
    # E[x^2] - E[x]^2 cancellation).
    centered = x - mean
    denom = float(max(d_layer - 1, 1))  # torch.std default: unbiased (N-1)
    var = jnp.sum(centered * centered, axis=-1, keepdims=True) * (1.0 / denom)
    std = jnp.sqrt(var)

    # Exact reciprocal: the kernel is HBM-bound with ample VALU/EUP slack, so
    # exact math costs ~0 wall-clock and keeps full f32 accuracy.
    inv = 1.0 / (std + eps)

    g = gamma_ref[...].astype(jnp.float32)
    b = beta_ref[...].astype(jnp.float32)
    # Reassociated epilogue: ((x - mean) * inv) * g + b never materializes a
    # (tm, D) "g * inv" broadcast temporary.
    o_ref[...] = ((centered * inv) * g + b).astype(o_ref.dtype)


def _vmem_capacity_bytes():
    """Physical VMEM of the current part (128 MiB on v5e/v6e, 64 MiB per TC on
    v7x).  Falls back to the most conservative value if the query is
    unavailable (e.g. AOT compile / interpret mode)."""
    try:
        info = pltpu.get_tpu_info()
        cap = getattr(info, "vmem_capacity_bytes", None)
        if cap:
            return int(cap)
    except Exception:
        pass
    return 64 * 1024 * 1024


def _row_axis_semantics():
    """Grid semantics for the row axis.  "parallel" already lets Mosaic shard
    parallel axes across TensorCores; when we can positively identify a
    multi-core part (v7x: 2 TCs), request explicit core-parallel sharding so
    both cores' DMA engines drive the ~3.2 TB/s HBM."""
    try:
        info = pltpu.get_tpu_info()
        n_cores = None
        for name in ("num_cores", "core_count", "num_tensorcores"):
            v = getattr(info, name, None)
            if isinstance(v, int) and v > 0:
                n_cores = v
                break
        if n_cores is not None and n_cores >= 2 and hasattr(pltpu, "CORE_PARALLEL"):
            return (pltpu.CORE_PARALLEL,)
    except Exception:
        pass
    return ("parallel",)


def _pick_tm(n_rows, d, itemsize, budget_bytes):
    """Row-tile size: as large as the per-generation VMEM budget allows.
    Blocks are capped by bytes (not by a fixed row count) so small/medium D
    still gets >= ~2 MiB input blocks (the ~86% HBM-roofline plateau)."""
    # Double-buffered input + output tiles plus ~4 f32 words of temporaries per
    # element (f32 copy, centered copy, epilogue temps).
    per_row_bytes = d * (4 * itemsize + 16)
    tm = max(8, budget_bytes // per_row_bytes)
    # Byte-capped by the budget above; 8192 only bounds index arithmetic.
    tm = min(tm, 8192)

    # Sublane packing: 8 for f32, 16 for bf16, 32 for 8-bit dtypes.
    pack = 32 if itemsize == 1 else (16 if itemsize == 2 else 8)
    # Don't make the tile (much) larger than the actual row count.
    tm = min(tm, pl.cdiv(n_rows, pack) * pack)
    tm = max(pack, (tm // pack) * pack)
    # TODO(synk): for very large D on v7x (64 MiB VMEM per TC) even a pack-row
    # block may not fit; a lane-tiled two-pass fallback would degrade
    # gracefully there instead of failing to allocate.
    return int(tm)


def layer_norm(x, std_hat, mean_hat, eps=1e-6, *, tm=None):
    """x: (..., D). std_hat/mean_hat: (D,). Returns same shape/dtype as x."""
    orig_shape = x.shape
    D = orig_shape[-1]
    x2 = x.reshape(-1, D)
    R = x2.shape[0]
    itemsize = jnp.dtype(x.dtype).itemsize

    # Generation-aware VMEM budgeting: ~75% of physical as the scoped limit
    # (96 MiB on 128 MiB v5e/v6e, 48 MiB on 64 MiB v7x), half of that as the
    # tile budget (48 / 24 MiB respectively).
    vmem_cap = max(32 * 1024 * 1024,
                   min(_vmem_capacity_bytes(), 128 * 1024 * 1024))
    vmem_limit = min((vmem_cap * 3) // 4, vmem_cap - 8 * 1024 * 1024)
    tile_budget = vmem_limit // 2

    if tm is None:
        tm = _pick_tm(R, D, itemsize, tile_budget)

    gamma = std_hat.reshape(1, D)
    beta = mean_hat.reshape(1, D)

    kernel = functools.partial(_layernorm_kernel, eps=eps, d_layer=D)

    # Ragged last block is handled by Pallas; no pad/concatenate HBM copy.
    grid = (pl.cdiv(R, tm),)

    cost = pl.CostEstimate(
        flops=8 * R * D,
        transcendentals=R,
        bytes_accessed=(2 * R * D + 2 * D) * itemsize,
    )

    # NOTE: for D < 128 the output stores are lane-masked (partial vregs); a
    # lane-dense repack (folding rows into lanes) would help there, but the
    # production case (D >= 512) is already lane-dense so it is skipped here.
    out = pl.pallas_call(
        kernel,
        out_shape=jax.ShapeDtypeStruct((R, D), x.dtype),
        grid_spec=pltpu.PrefetchScalarGridSpec(
            num_scalar_prefetch=0,
            grid=grid,
            in_specs=[
                pl.BlockSpec((tm, D), lambda i: (i, 0)),
                # Constant block index -> Pallas re-uses the buffer and skips
                # re-DMA after the first grid step.
                pl.BlockSpec((1, D), lambda i: (0, 0)),
                pl.BlockSpec((1, D), lambda i: (0, 0)),
            ],
            out_specs=pl.BlockSpec((tm, D), lambda i: (i, 0)),
        ),
        compiler_params=pltpu.CompilerParams(
            # Independent rows: core-parallel on identified multi-TC parts
            # (v7x), "parallel" otherwise (neutral on single-TC v5e/v6e).
            dimension_semantics=_row_axis_semantics(),
            vmem_limit_bytes=int(vmem_limit),
        ),
        cost_estimate=cost,
    )(x2, gamma, beta)

    return out.reshape(orig_shape)


if __name__ == "__main__":
    key = jax.random.PRNGKey(0)
    batch, seq, hidden = 2, 8, 32
    x = jax.random.normal(key, (batch, seq, hidden), dtype=jnp.float32)

    # Deterministic parameter init matching nn.Parameter(torch.zeros/ones(d_layer))
    mean_hat = jnp.zeros((hidden,), dtype=jnp.float32)
    std_hat = jnp.ones((hidden,), dtype=jnp.float32)

    y = layer_norm(x, std_hat, mean_hat, eps=1e-6)
    jax.block_until_ready(y)

    # Pure-JAX reference (torch semantics: Bessel-corrected std, eps added to std).
    mean = jnp.mean(x, axis=-1, keepdims=True)
    std = jnp.std(x, axis=-1, keepdims=True, ddof=1)
    ref = std_hat * ((x - mean) / (std + 1e-6)) + mean_hat
    # Exact in-kernel math (two-pass variance, exact reciprocal) -> tight tol.
    assert jnp.allclose(y, ref, atol=1e-5, rtol=1e-5), "mismatch vs reference"

    print("KERNEL_OK")
</pallas_src>

<mosaic_0001>
module attributes {stable_mosaic.version = 11 : i64} {
  func.func @_layernorm_kernel(%arg0: i32, %arg1: memref<16x32xf32, #tpu.memory_space<vmem>>, %arg2: memref<1x32xf32, #tpu.memory_space<vmem>>, %arg3: memref<1x32xf32, #tpu.memory_space<vmem>>, %arg4: memref<16x32xf32, #tpu.memory_space<vmem>>) attributes {dimension_semantics = [#tpu.dimension_semantics<parallel>], iteration_bounds = array<i64: 1>, scalar_prefetch = 0 : i64, scratch_operands = 0 : i64, tpu.core_type = #tpu.core_type<tc>, window_params = [{transform_indices = @transform_0, window_bounds = array<i64: 16, 32>}, {pipeline_mode = #tpu.pipeline_mode<synchronous>, transform_indices = @transform_1, window_bounds = array<i64: 1, 32>}, {pipeline_mode = #tpu.pipeline_mode<synchronous>, transform_indices = @transform_2, window_bounds = array<i64: 1, 32>}, {transform_indices = @transform_3, window_bounds = array<i64: 16, 32>}]} {
    %c0 = arith.constant 0 : index
    %c0_0 = arith.constant 0 : index
    %0 = vector.load %arg1[%c0, %c0_0] : memref<16x32xf32, #tpu.memory_space<vmem>>, vector<16x32xf32>
    %cst = arith.constant dense<0.000000e+00> : vector<16xf32>
    %1 = vector.multi_reduction <add>, %0, %cst [1] : vector<16x32xf32> to vector<16xf32>
    %2 = vector.shape_cast %1 : vector<16xf32> to vector<16x1xf32>
    %cst_1 = arith.constant 3.125000e-02 : f32
    %3 = vector.broadcast %cst_1 : f32 to vector<16x1xf32>
    %4 = arith.mulf %2, %3 : vector<16x1xf32>
    %5 = vector.broadcast %4 : vector<16x1xf32> to vector<16x32xf32>
    %6 = arith.subf %0, %5 : vector<16x32xf32>
    %7 = arith.mulf %6, %6 : vector<16x32xf32>
    %cst_2 = arith.constant dense<0.000000e+00> : vector<16xf32>
    %8 = vector.multi_reduction <add>, %7, %cst_2 [1] : vector<16x32xf32> to vector<16xf32>
    %9 = vector.shape_cast %8 : vector<16xf32> to vector<16x1xf32>
    %cst_3 = arith.constant 0.0322580636 : f32
    %10 = vector.broadcast %cst_3 : f32 to vector<16x1xf32>
    %11 = arith.mulf %9, %10 : vector<16x1xf32>
    %12 = math.sqrt %11 : vector<16x1xf32>
    %cst_4 = arith.constant 9.99999997E-7 : f32
    %13 = vector.broadcast %cst_4 : f32 to vector<16x1xf32>
    %14 = arith.addf %12, %13 : vector<16x1xf32>
    %cst_5 = arith.constant 1.000000e+00 : f32
    %15 = vector.broadcast %cst_5 : f32 to vector<16x1xf32>
    %16 = arith.divf %15, %14 : vector<16x1xf32>
    %c0_6 = arith.constant 0 : index
    %c0_7 = arith.constant 0 : index
    %17 = vector.load %arg2[%c0_6, %c0_7] : memref<1x32xf32, #tpu.memory_space<vmem>>, vector<1x32xf32>
    %c0_8 = arith.constant 0 : index
    %c0_9 = arith.constant 0 : index
    %18 = vector.load %arg3[%c0_8, %c0_9] : memref<1x32xf32, #tpu.memory_space<vmem>>, vector<1x32xf32>
    %19 = vector.broadcast %16 : vector<16x1xf32> to vector<16x32xf32>
    %20 = arith.mulf %6, %19 : vector<16x32xf32>
    %21 = vector.broadcast %17 : vector<1x32xf32> to vector<16x32xf32>
    %22 = arith.mulf %20, %21 : vector<16x32xf32>
    %23 = vector.broadcast %18 : vector<1x32xf32> to vector<16x32xf32>
    %24 = arith.addf %22, %23 : vector<16x32xf32>
    %c0_10 = arith.constant 0 : index
    %c0_11 = arith.constant 0 : index
    %25 = vector.load %arg4[%c0_10, %c0_11] : memref<16x32xf32, #tpu.memory_space<vmem>>, vector<16x32xf32>
    tpu.vector_store %arg4[%c0_10, %c0_11], %24 {strides = array<i32>} : memref<16x32xf32, #tpu.memory_space<vmem>>, vector<16x32xf32>,
    return
  }
  func.func @transform_0(%arg0: i32) -> (i32, i32) {
    %c0_i32 = arith.constant 0 : i32
    %c0_i32_0 = arith.constant 0 : i32
    return %arg0, %c0_i32 : i32, i32
  }
  func.func @transform_1(%arg0: i32) -> (i32, i32) {
    %c0_i32 = arith.constant 0 : i32
    %c0_i32_0 = arith.constant 0 : i32
    %c0_i32_1 = arith.constant 0 : i32
    return %c0_i32, %c0_i32_0 : i32, i32
  }
  func.func @transform_2(%arg0: i32) -> (i32, i32) {
    %c0_i32 = arith.constant 0 : i32
    %c0_i32_0 = arith.constant 0 : i32
    %c0_i32_1 = arith.constant 0 : i32
    return %c0_i32, %c0_i32_0 : i32, i32
  }
  func.func @transform_3(%arg0: i32) -> (i32, i32) {
    %c0_i32 = arith.constant 0 : i32
    %c0_i32_0 = arith.constant 0 : i32
    return %arg0, %c0_i32 : i32, i32
  }
}

</mosaic_0001>

<llo_original>
// kernel: tpu_custom_call.1
$region0: #{tpu_custom_call.1}
  #allocation0 [shape = 'u32[]', space=smem, size = 0x4, offset = 0x4, fixed_abs, tag = 'smem constant byte address 0x4 - core index']
  #allocation1 [shape = 'u32[144,128]{1,0:T(1,128)}', space=vmem, size = 0x12000, scoped, tag = 'internal scratch']
  %s0 = inlined_call_operand.hbm [shape: f32[16,32], index: 0, kind: input, shape index: {}]
  %s1 = inlined_call_operand.vmem [shape: f32[1,32], index: 1, kind: input, shape index: {}]
  %s2 = inlined_call_operand.vmem [shape: f32[1,32], index: 2, kind: input, shape index: {}]
  %s3 = inlined_call_operand.hbm [shape: f32[16,32], index: 3, kind: output, shape index: {}]
  %s4 = sld [smem:[#allocation0]]
  $region26: #{tpu_custom_call.1} parent=0
    _
  %s6 = ssub.s32 1, %s4
  %s7 = scalar_select 0, %s6, %s4
  $region1: #{tpu_custom_call.1} parent=0
    #allocation2 [shape = 'u8[8192]{0}', space=vmem, size = 0x2000, scoped, tag = 'input window, operand 0, single buffered']
    #allocation3 [shape = 's32[1]{0}', space=sflag, size = 0x4, scoped, tag = 'scoped memory for tpu_custom_call.1']
    #allocation4 [shape = 's32[1]{0}', space=sflag, size = 0x4, scoped, tag = 'scoped memory for tpu_custom_call.1']
    #allocation5 [shape = 'u8[8192]{0}', space=vmem, size = 0x2000, scoped, tag = 'output window, operand 0, single buffered']
    %8 = vsyncpa [#allocation3], 0
    %9 = vsyncpa [#allocation4], 0
    // Predicated region
    $region2: #{tpu_custom_call.1} parent=1 // pred_check
      _
    $region3: #{tpu_custom_call.1} parent=1 // pred_check_branch
      %11 = sbr.rel (0) target = $region5
    $region4: #{tpu_custom_call.1} parent=1 // pred_region
      %s13 = ssub.s32 256, 256
      %14 = vsyncadd [#allocation3], %s13
      %s15 = sshll.u32 [#allocation2], 4
      %s16 = int_to_ptr.vmem [resolvable:$true] %s15
      %21 = dma.hbm_to_vmem [thread:$0]  %s0, 256, %s16, [#allocation3], 128, 128, 8
    $region5: #{tpu_custom_call.1} parent=1 // pred_fallthru
      _
    // Predicated region
    $region6: #{tpu_custom_call.1} parent=1 // pred_check
      _
    $region7: #{tpu_custom_call.1} parent=1 // pred_check_branch
      %23 = sbr.rel (0) target = $region9
    $region8: #{tpu_custom_call.1} parent=1 // pred_region
      _
    $region9: #{tpu_custom_call.1} parent=1 // pred_fallthru
      _
    // Predicated region
    $region10: #{tpu_custom_call.1} parent=1 // pred_check
      _
    $region11: #{tpu_custom_call.1} parent=1 // pred_check_branch
      %25 = sbr.rel (0) target = $region13
    $region12: #{tpu_custom_call.1} parent=1 // pred_region
      _
    $region13: #{tpu_custom_call.1} parent=1 // pred_fallthru
      _
    // Predicated region
    $region14: #{tpu_custom_call.1} parent=1 // pred_check
      _
    $region15: #{tpu_custom_call.1} parent=1 // pred_check_branch
      %27 = sbr.rel (0) target = $region17
    $region16: #{tpu_custom_call.1} parent=1 // pred_region
      %28 = dma.done [#allocation3], 256
    $region17: #{tpu_custom_call.1} parent=1 // pred_fallthru
      _
    %v29 = vld [vmem:[#allocation2] sm:$0xff]
    %v30 = vld [vmem:[#allocation2 + $0x8] sm:$0xff]
    %vm31 = vcmask 261120
    %v32 = vsel %vm31, %v29, 0.0
    %33 = vadd.xlane.f32.xlu0 %v32
    %v34 = vpop.xlane.xlu0 %33
    %v35 = vsel %vm31, %v30, 0.0
    %36 = vadd.xlane.f32.xlu0 %v35
    %v37 = vpop.xlane.xlu0 %36
    %v38 = vmul.f32 %v34, 0.03125
    %v39 = vmul.f32 %v37, 0.03125
    %v40 = vsub.f32 %v29, %v38
    %v41 = vsub.f32 %v30, %v39
    %v42 = vmul.f32 %v40, %v40
    %v43 = vmul.f32 %v41, %v41
    %v44 = vsel %vm31, %v42, 0.0
    %45 = vadd.xlane.f32.xlu0 %v44
    %v46 = vpop.xlane.xlu0 %45
    %v47 = vsel %vm31, %v43, 0.0
    %48 = vadd.xlane.f32.xlu0 %v47
    %v49 = vpop.xlane.xlu0 %48
    %v50 = vmul.f32 %v46, 0.032258064
    %v51 = vmul.f32 %v49, 0.032258064
    %v52 = vrsqrt.pop %v50
    %v53 = vmul.f32 %v50, %v52
    %vm54 = vcmp.eq.f32.partialorder %v50, inf
    %v55 = vsel %vm54, %v50, %v53
    %vm56 = vcmp.eq.f32.partialorder %v50, 0.0
    %v57 = vand.u32 %v50, 2147483648
    %v58 = vsel %vm56, %v57, %v55
    %v59 = vrsqrt.pop %v51
    %v60 = vmul.f32 %v51, %v59
    %vm61 = vcmp.eq.f32.partialorder %v51, inf
    %v62 = vsel %vm61, %v51, %v60
    %vm63 = vcmp.eq.f32.partialorder %v51, 0.0
    %v64 = vand.u32 %v51, 2147483648
    %v65 = vsel %vm63, %v64, %v62
    %v66 = vadd.f32 %v58, 1e-06
    %v67 = vadd.f32 %v65, 1e-06
    %v68 = vrcp.pop %v66
    %v69 = vmul.f32 1.0, %v68
    %v70 = vrcp.pop %v67
    %v71 = vmul.f32 1.0, %v70
    %v72 = vld [vmem:[%s1] sm:$0x1]
    %v73 = vld [vmem:[%s2] sm:$0x1]
    %v74 = vmul.f32 %v40, %v69
    %v75 = vmul.f32 %v41, %v71
    %v77 = vlaneseq
    %v78 = vshrl.u32 %v77, 7
    %v79 = vsub.s32 0, %v78
    %v80 = vrot.slane %v72, %v79
    %v82 = vmul.f32 %v74, %v80
    %v83 = vmul.f32 %v75, %v80
    %v85 = vlaneseq
    %v86 = vshrl.u32 %v85, 7
    %v87 = vsub.s32 0, %v86
    %v88 = vrot.slane %v73, %v87
    %v90 = vadd.f32 %v82, %v88
    %v91 = vadd.f32 %v83, %v88
    %92 = vst.msk [vmem:[#allocation5] sm:$0xff] %vm31, %v90
    %93 = vst.msk [vmem:[#allocation5 + $0x8] sm:$0xff] %vm31, %v91
    // Predicated region
    $region18: #{tpu_custom_call.1} parent=1 // pred_check
      _
    $region19: #{tpu_custom_call.1} parent=1 // pred_check_branch
      %95 = sbr.rel (0) target = $region21
    $region20: #{tpu_custom_call.1} parent=1 // pred_region
      %s97 = ssub.s32 256, 256
      %98 = vsyncadd [#allocation4], %s97
      %s99 = sshll.u32 [#allocation5], 4
      %s100 = int_to_ptr.vmem [resolvable:$true] %s99
      %105 = dma.vmem_to_hbm [thread:$0]  %s100, 256, %s3, [#allocation4], 128, 128, 8
    $region21: #{tpu_custom_call.1} parent=1 // pred_fallthru
      _
    // Predicated region
    $region22: #{tpu_custom_call.1} parent=1 // pred_check
      _
    $region23: #{tpu_custom_call.1} parent=1 // pred_check_branch
      %107 = sbr.rel (0) target = $region25
    $region24: #{tpu_custom_call.1} parent=1 // pred_region
      %108 = dma.done [#allocation4], 256
    $region25: #{tpu_custom_call.1} parent=1 // pred_fallthru
      _
    %109 = vsyncpa [#allocation3], 1
    %110 = vsyncpa [#allocation4], 1

</llo_original>
